<compile_context>
chip_gen: v5e
topology: v5e:2x2
jax: 0.10.0
libtpu: 0.0.40
codegen_flags: <defaults>
</compile_context>

<pallas_src>
import functools
import math

import jax
import jax.numpy as jnp
from jax import lax
from jax.experimental import pallas as pl
from jax.experimental.pallas import tpu as pltpu


_SUBLANE_MIN = {1: 32, 2: 16, 4: 8}   # min sublane tile by itemsize (int8/fp8, bf16, f32)


def _round_up(x, m):
    return ((x + m - 1) // m) * m


def _lcm(a, b):
    return a * b // math.gcd(a, b)


def _padded_tile_bytes(rows, cols, itemsize):
    """Physical VMEM footprint of a (rows, cols) tile: lanes pad to 128, sublanes to the
    dtype minimum."""
    sub = _SUBLANE_MIN.get(itemsize, 8)
    return _round_up(rows, sub) * _round_up(cols, 128) * itemsize


# --------------------------------------------------------------------------------------
# Kernel: per row-tile of the flattened (S*B, I) encoder tensor compute raw attention
# energies  w_score . tanh(enc @ We^T + (hidden @ Wh^T + b_attn))  as a lane-dense (1, tN) row.
# --------------------------------------------------------------------------------------
def _tree_attn_energies_kernel(enc_ref, qb_ref, we_ref, ws_ref, out_ref, *, tanh_dtype):
    tn = enc_ref.shape[0]
    qb_rows, h = qb_ref.shape

    # Feed the MXU in the weights' dtype (bf16 fast path / f32 exact path); accumulate f32.
    enc = enc_ref[...].astype(we_ref.dtype)                          # (tN, I)
    e_proj = jnp.dot(enc, we_ref[...],
                     preferred_element_type=jnp.float32)             # (tN, H) f32, MXU

    # Broadcast the per-batch query projection: tile rows repeat the (qb_rows, H) pattern
    # exactly tN // qb_rows times.  qb_rows is a multiple of the sublane minimum (or equals
    # tN), so the reshape is layout-free.  tanh_dtype=bf16 is a v6e/v7x option (bf16 EUP);
    # keep f32 on v5e.
    feat = jnp.tanh((e_proj.reshape(tn // qb_rows, qb_rows, h)
                     + qb_ref[...][None]).astype(tanh_dtype))        # VPU add + EUP tanh
    feat = feat.reshape(tn, h)

    # Lane-dense score reduction on the MXU: (1, H) x (tN, H)^T -> (1, tN) f32.
    out_ref[...] = lax.dot_general(
        ws_ref[...], feat.astype(ws_ref.dtype),
        dimension_numbers=(((1,), (1,)), ((), ())),
        preferred_element_type=jnp.float32)


# --------------------------------------------------------------------------------------
# Wrapper
# --------------------------------------------------------------------------------------
def tree_attn(hidden, encoder_outputs, params, seq_mask=None, *,
              compute_dtype=jnp.bfloat16, tanh_dtype=jnp.float32, tile_rows=None):
    """hidden: (B, H); encoder_outputs: (S, B, I) (PyTorch layout); seq_mask: (B, S) bool.
    Returns (B, 1, S), matching TreeAttn.forward."""
    W_attn, b_attn, W_score, b_score = params

    S, B, I = encoder_outputs.shape
    B2, H = hidden.shape
    assert B == B2, "Batch sizes of query and sequence mismatch in TreeAttn"

    # Split the concat-Linear weight; concat order in the module is [hidden ; encoder_outputs].
    wh_t = W_attn[:, :H].T.astype(jnp.float32)       # (H, H)  tiny, wrapper-side
    we_t = W_attn[:, H:].T.astype(compute_dtype)     # (I, H)  resident in VMEM
    ws_row = W_score.astype(compute_dtype)           # (1, H)  resident score-weight row

    # Flatten (S, B, I) -> (S*B, I): contiguous collapse, no HBM transpose / copy.
    N = S * B
    enc2d = encoder_outputs.reshape(N, I)
    enc_item = enc2d.dtype.itemsize
    w_item = jnp.dtype(compute_dtype).itemsize

    # ---- Row-tile sizing --------------------------------------------------------------
    sub_min = _SUBLANE_MIN.get(enc_item, 8)
    base_q = _lcm(sub_min, B)      # qb-pattern granularity (sublane + batch aligned)
    L = _lcm(B, 128)               # row-tile granularity: lane-dense (1, tN) output needs
                                   # tN % 128 == 0 (or tN == N); also a multiple of B, sub_min.

    if N < L:
        tN = N                     # single full-array tile (block == full dims is always legal)
    else:
        # Per-row VMEM working bytes: double-buffered enc stream + f32 intermediates + out row.
        per_row = (2 * _round_up(I, 128) * enc_item
                   + 2 * _round_up(H, 128) * 4
                   + 2 * 4)
        if tile_rows is not None:
            tN = max(L, _round_up(tile_rows, L))
        else:
            target_bytes = 6 * 1024 * 1024                       # multi-MiB working set / step
            tN = max(L, (target_bytes // per_row) // L * L)
            # Keep >= ~8 grid steps on large N so the "parallel" axis can split across v7x's TCs.
            tN = min(tN, max(L, (N // (8 * L)) * L))
        tN = min(tN, _round_up(N, L))
    grid = (pl.cdiv(N, tN),)

    # ---- Query-side projection folded with b_attn, kept as a small repeating pattern ----
    qb = hidden.astype(jnp.float32) @ wh_t + b_attn.astype(jnp.float32)[None, :]   # (B, H)
    qb_rows = base_q if tN % base_q == 0 else tN       # fallback only for tiny single-tile N
    qb_pat = jnp.tile(qb, (qb_rows // B, 1))           # (qb_rows, H) f32, resident (tiny)

    # ---- Cost / VMEM bookkeeping (layout-aware) -----------------------------------------
    cost = pl.CostEstimate(
        flops=2 * N * I * H + 2 * N * H,
        transcendentals=N * H,
        bytes_accessed=int(N * I * enc_item + N * 4
                           + I * H * w_item + H * w_item + qb_rows * H * 4),
    )
    vmem_needed = (
        2 * _padded_tile_bytes(tN, I, enc_item)        # double-buffered enc tiles
        + 2 * _padded_tile_bytes(1, tN, 4)             # double-buffered (1, tN) out tiles
        + _padded_tile_bytes(qb_rows, H, 4)            # single-buffered residents
        + _padded_tile_bytes(I, H, w_item)
        + _padded_tile_bytes(1, H, w_item)
        + 2 * _padded_tile_bytes(tN, H, 4)             # e_proj / feat intermediates
    )
    # 2x headroom, capped at 48 MiB (safe under v7x's 64 MiB per-TensorCore VMEM).
    vmem_limit = int(min(max(2 * vmem_needed, 32 * 1024 * 1024), 48 * 1024 * 1024))

    def _resident_spec(shape):
        # Constant-index blocks never change: single-buffer them to reclaim VMEM.
        try:
            return pl.BlockSpec(shape, lambda i: (0,) * len(shape),
                                pipeline_mode=pl.Buffered(1))
        except TypeError:   # older jax without pipeline_mode: fall back to default buffering
            return pl.BlockSpec(shape, lambda i: (0,) * len(shape))

    kernel = functools.partial(_tree_attn_energies_kernel, tanh_dtype=tanh_dtype)

    energies_row = pl.pallas_call(
        kernel,
        out_shape=jax.ShapeDtypeStruct((1, N), jnp.float32),
        grid=grid,
        in_specs=[
            pl.BlockSpec((tN, I), lambda i: (i, 0)),   # streamed encoder tile
            _resident_spec((qb_rows, H)),              # resident query-projection pattern
            _resident_spec((I, H)),                    # resident We^T
            _resident_spec((1, H)),                    # resident score weight row
        ],
        out_specs=pl.BlockSpec((1, tN), lambda i: (0, i)),   # lane-dense energies
        compiler_params=pltpu.CompilerParams(
            dimension_semantics=("parallel",),          # v7x: shard row tiles across both TCs
            vmem_limit_bytes=vmem_limit,
        ),
        cost_estimate=cost,
    )(enc2d, qb_pat, we_t, ws_row)

    # Tiny (B, S) epilogue in the wrapper: reshape/transpose, bias, mask, softmax.
    energies = energies_row.reshape(S, B).T + b_score.astype(jnp.float32)   # (B, S)
    if seq_mask is not None:
        energies = jnp.where(seq_mask, jnp.float32(-1e12), energies)
    attn = jax.nn.softmax(energies, axis=1)
    return attn[:, None, :]                                                  # (B, 1, S)


# --------------------------------------------------------------------------------------
# Params + pure-JAX reference (transcription of the PyTorch forward) for validation
# --------------------------------------------------------------------------------------
def init_params(key, input_size, hidden_size):
    """Deterministic PyTorch-Linear-style init."""
    k1, k2, k3, k4 = jax.random.split(key, 4)
    fan_attn = hidden_size + input_size
    ba = 1.0 / float(fan_attn) ** 0.5
    W_attn = jax.random.uniform(k1, (hidden_size, fan_attn), jnp.float32, -ba, ba)
    b_attn = jax.random.uniform(k2, (hidden_size,), jnp.float32, -ba, ba)
    bs = 1.0 / float(hidden_size) ** 0.5
    W_score = jax.random.uniform(k3, (1, hidden_size), jnp.float32, -bs, bs)
    b_score = jax.random.uniform(k4, (1,), jnp.float32, -bs, bs)
    return (W_attn, b_attn, W_score, b_score)


def tree_attn_ref(hidden, encoder_outputs, params, seq_mask=None):
    W_attn, b_attn, W_score, b_score = params
    S, B, _ = encoder_outputs.shape
    H = hidden.shape[1]
    q = jnp.broadcast_to(hidden[None], (S, B, H))
    energy_in = jnp.concatenate([q, encoder_outputs], axis=2).reshape(S * B, -1)
    feat = jnp.tanh(energy_in @ W_attn.T + b_attn)
    e = (feat @ W_score.T + b_score)[:, 0].reshape(S, B).T          # (B, S)
    if seq_mask is not None:
        e = jnp.where(seq_mask, jnp.float32(-1e12), e)
    e = jax.nn.softmax(e, axis=1)
    return e[:, None, :]


if __name__ == "__main__":
    input_size, hidden_size = 24, 32
    key = jax.random.PRNGKey(0)
    kp, kh, ke, ke2 = jax.random.split(key, 4)
    params = init_params(kp, input_size, hidden_size)

    # Case 1: tiny shapes (single full-array tile path), exact f32 MXU feed.
    B, S = 2, 8
    hidden = jax.random.normal(kh, (B, hidden_size), jnp.float32)
    encoder_outputs = jax.random.normal(ke, (S, B, input_size), jnp.float32)
    seq_mask = jnp.zeros((B, S), bool).at[1, 6:].set(True)          # mask tail of batch 1

    ref = tree_attn_ref(hidden, encoder_outputs, params, seq_mask)
    out_f32 = jax.block_until_ready(
        tree_attn(hidden, encoder_outputs, params, seq_mask, compute_dtype=jnp.float32))
    assert out_f32.shape == (B, 1, S)
    assert jnp.allclose(out_f32, ref, rtol=1e-4, atol=5e-5), "f32 kernel mismatch (single tile)"

    # Case 2: longer sequence -> multi-step grid with a partial (masked) last tile.
    S2 = 300
    enc2 = jax.random.normal(ke2, (S2, B, input_size), jnp.float32)
    mask2 = jnp.zeros((B, S2), bool).at[1, 250:].set(True)
    ref2 = tree_attn_ref(hidden, enc2, params, mask2)

    out2_f32 = jax.block_until_ready(
        tree_attn(hidden, enc2, params, mask2, compute_dtype=jnp.float32))
    assert jnp.allclose(out2_f32, ref2, rtol=1e-4, atol=5e-5), "f32 kernel mismatch (multi tile)"

    out2_bf16 = jax.block_until_ready(
        tree_attn(hidden, enc2, params, mask2))     # default bf16 MXU feed, f32 accumulation
    assert jnp.allclose(out2_bf16, ref2, rtol=5e-2, atol=2e-2), "bf16 kernel mismatch"

    print("KERNEL_OK")
</pallas_src>

<mosaic_0001>
module attributes {stable_mosaic.version = 11 : i64} {
  func.func @_tree_attn_energies_kernel(%arg0: i32, %arg1: memref<16x24xf32, #tpu.memory_space<vmem>>, %arg2: memref<8x32xf32, #tpu.memory_space<vmem>>, %arg3: memref<24x32xf32, #tpu.memory_space<vmem>>, %arg4: memref<1x32xf32, #tpu.memory_space<vmem>>, %arg5: memref<1x16xf32, #tpu.memory_space<vmem>>) attributes {dimension_semantics = [#tpu.dimension_semantics<parallel>], iteration_bounds = array<i64: 1>, scalar_prefetch = 0 : i64, scratch_operands = 0 : i64, tpu.core_type = #tpu.core_type<tc>, window_params = [{transform_indices = @transform_0, window_bounds = array<i64: 16, 24>}, {pipeline_mode = #tpu.pipeline_mode<synchronous>, transform_indices = @transform_1, window_bounds = array<i64: 8, 32>}, {pipeline_mode = #tpu.pipeline_mode<synchronous>, transform_indices = @transform_2, window_bounds = array<i64: 24, 32>}, {pipeline_mode = #tpu.pipeline_mode<synchronous>, transform_indices = @transform_3, window_bounds = array<i64: 1, 32>}, {transform_indices = @transform_4, window_bounds = array<i64: 1, 16>}]} {
    %c0 = arith.constant 0 : index
    %c0_0 = arith.constant 0 : index
    %0 = vector.load %arg1[%c0, %c0_0] : memref<16x24xf32, #tpu.memory_space<vmem>>, vector<16x24xf32>
    %c0_1 = arith.constant 0 : index
    %c0_2 = arith.constant 0 : index
    %1 = vector.load %arg3[%c0_1, %c0_2] : memref<24x32xf32, #tpu.memory_space<vmem>>, vector<24x32xf32>
    %cst = arith.constant dense<0.000000e+00> : vector<16x32xf32>
    %2 = tpu.matmul %0, %1, %cst {dimension_numbers = #tpu.dot_dimension_numbers<[1], [0], [0], [1], [0, 0, 1, 1], [], []>} : vector<16x24xf32>, vector<24x32xf32>, vector<16x32xf32> -> vector<16x32xf32>
    %3 = vector.shape_cast %2 : vector<16x32xf32> to vector<2x8x32xf32>
    %c0_3 = arith.constant 0 : index
    %c0_4 = arith.constant 0 : index
    %4 = vector.load %arg2[%c0_3, %c0_4] : memref<8x32xf32, #tpu.memory_space<vmem>>, vector<8x32xf32>
    %5 = vector.shape_cast %4 : vector<8x32xf32> to vector<1x8x32xf32>
    %6 = vector.broadcast %5 : vector<1x8x32xf32> to vector<2x8x32xf32>
    %7 = arith.addf %3, %6 : vector<2x8x32xf32>
    %8 = math.tanh %7 : vector<2x8x32xf32>
    %9 = vector.shape_cast %8 : vector<2x8x32xf32> to vector<16x32xf32>
    %c0_5 = arith.constant 0 : index
    %c0_6 = arith.constant 0 : index
    %10 = vector.load %arg4[%c0_5, %c0_6] : memref<1x32xf32, #tpu.memory_space<vmem>>, vector<1x32xf32>
    %cst_7 = arith.constant dense<0.000000e+00> : vector<1x16xf32>
    %11 = tpu.matmul %10, %9, %cst_7 {dimension_numbers = #tpu.dot_dimension_numbers<[1], [1], [0], [0], [0, 0, 1, 0], [], []>} : vector<1x32xf32>, vector<16x32xf32>, vector<1x16xf32> -> vector<1x16xf32>
    %c0_8 = arith.constant 0 : index
    %c0_9 = arith.constant 0 : index
    %12 = vector.load %arg5[%c0_8, %c0_9] : memref<1x16xf32, #tpu.memory_space<vmem>>, vector<1x16xf32>
    tpu.vector_store %arg5[%c0_8, %c0_9], %11 {strides = array<i32>} : memref<1x16xf32, #tpu.memory_space<vmem>>, vector<1x16xf32>,
    return
  }
  func.func @transform_0(%arg0: i32) -> (i32, i32) {
    %c0_i32 = arith.constant 0 : i32
    %c0_i32_0 = arith.constant 0 : i32
    return %arg0, %c0_i32 : i32, i32
  }
  func.func @transform_1(%arg0: i32) -> (i32, i32) {
    %c0_i32 = arith.constant 0 : i32
    %c0_i32_0 = arith.constant 0 : i32
    %c0_i32_1 = arith.constant 0 : i32
    return %c0_i32, %c0_i32_0 : i32, i32
  }
  func.func @transform_2(%arg0: i32) -> (i32, i32) {
    %c0_i32 = arith.constant 0 : i32
    %c0_i32_0 = arith.constant 0 : i32
    %c0_i32_1 = arith.constant 0 : i32
    return %c0_i32, %c0_i32_0 : i32, i32
  }
  func.func @transform_3(%arg0: i32) -> (i32, i32) {
    %c0_i32 = arith.constant 0 : i32
    %c0_i32_0 = arith.constant 0 : i32
    %c0_i32_1 = arith.constant 0 : i32
    return %c0_i32, %c0_i32_0 : i32, i32
  }
  func.func @transform_4(%arg0: i32) -> (i32, i32) {
    %c0_i32 = arith.constant 0 : i32
    %c0_i32_0 = arith.constant 0 : i32
    return %c0_i32, %arg0 : i32, i32
  }
}

</mosaic_0001>

<llo_original>
// kernel: tpu_custom_call.1
$region0: #{tpu_custom_call.1}
  #allocation0 [shape = 'u32[]', space=smem, size = 0x4, offset = 0x4, fixed_abs, tag = 'smem constant byte address 0x4 - core index']
  #allocation1 [shape = 'u32[72,128]{1,0:T(1,128)}', space=vmem, size = 0x9000, scoped, tag = 'internal scratch']
  %s0 = inlined_call_operand.hbm [shape: f32[16,24], index: 0, kind: input, shape index: {}]
  %s1 = inlined_call_operand.hbm [shape: f32[8,32], index: 1, kind: input, shape index: {}]
  %s2 = inlined_call_operand.hbm [shape: f32[24,32], index: 2, kind: input, shape index: {}]
  %s3 = inlined_call_operand.vmem [shape: f32[1,32], index: 3, kind: input, shape index: {}]
  %s4 = inlined_call_operand.hbm [shape: f32[1,16], index: 4, kind: output, shape index: {}]
  %s5 = sld [smem:[#allocation0]]
  $region38: #{tpu_custom_call.1} parent=0
    _
  %s7 = ssub.s32 1, %s5
  %s8 = scalar_select 0, %s7, %s5
  $region1: #{tpu_custom_call.1} parent=0
    #allocation2 [shape = 'u8[8192]{0}', space=vmem, size = 0x2000, scoped, tag = 'input window, operand 0, single buffered']
    #allocation3 [shape = 's32[1]{0}', space=sflag, size = 0x4, scoped, tag = 'scoped memory for tpu_custom_call.1']
    #allocation4 [shape = 's32[1]{0}', space=sflag, size = 0x4, scoped, tag = 'scoped memory for tpu_custom_call.1']
    #allocation5 [shape = 'u8[4096]{0}', space=vmem, size = 0x1000, scoped, tag = 'input window, operand 1, single buffered']
    #allocation6 [shape = 's32[1]{0}', space=sflag, size = 0x4, scoped, tag = 'scoped memory for tpu_custom_call.1']
    #allocation7 [shape = 'u8[12288]{0}', space=vmem, size = 0x3000, scoped, tag = 'input window, operand 2, single buffered']
    #allocation8 [shape = 'u8[512]{0}', space=vmem, size = 0x400, scoped, tag = 'output window, operand 0, single buffered']
    %9 = vsyncpa [#allocation3], 0
    %10 = vsyncpa [#allocation6], 0
    %11 = vsyncpa [#allocation4], 0
    // Predicated region
    $region2: #{tpu_custom_call.1} parent=1 // pred_check
      _
    $region3: #{tpu_custom_call.1} parent=1 // pred_check_branch
      %13 = sbr.rel (0) target = $region5
    $region4: #{tpu_custom_call.1} parent=1 // pred_region
      %15 = vsyncadd [#allocation3], 0
      %s16 = sshll.u32 %s0, 4
      %s17 = int_to_ptr.hbm [resolvable:$true] %s16
      %s18 = sshll.u32 [#allocation2], 4
      %s19 = int_to_ptr.vmem [resolvable:$true] %s18
      %24 = dma.hbm_to_vmem [thread:$0]  %s17, 256, %s19, [#allocation3], 128, 128, 8
    $region5: #{tpu_custom_call.1} parent=1 // pred_fallthru
      _
    // Predicated region
    $region6: #{tpu_custom_call.1} parent=1 // pred_check
      _
    $region7: #{tpu_custom_call.1} parent=1 // pred_check_branch
      %26 = sbr.rel (0) target = $region9
    $region8: #{tpu_custom_call.1} parent=1 // pred_region
      %28 = vsyncadd [#allocation6], 0
      %s30 = sshll.u32 %s1, 4
      %s31 = int_to_ptr.hbm [resolvable:$true] %s30
      %s32 = sshll.u32 [#allocation5], 4
      %s33 = int_to_ptr.vmem [resolvable:$true] %s32
      %35 = dma.hbm_to_vmem [thread:$0]  %s31, 128, %s33, [#allocation6]
    $region9: #{tpu_custom_call.1} parent=1 // pred_fallthru
      _
    // Predicated region
    $region10: #{tpu_custom_call.1} parent=1 // pred_check
      _
    $region11: #{tpu_custom_call.1} parent=1 // pred_check_branch
      %37 = sbr.rel (0) target = $region13
    $region12: #{tpu_custom_call.1} parent=1 // pred_region
      %39 = vsyncadd [#allocation6], 0
      %s40 = sshll.u32 %s2, 4
      %s41 = int_to_ptr.hbm [resolvable:$true] %s40
      %s42 = sshll.u32 [#allocation7], 4
      %s43 = int_to_ptr.vmem [resolvable:$true] %s42
      %48 = dma.hbm_to_vmem [thread:$0]  %s41, 384, %s43, [#allocation6], 128, 128, 8
    $region13: #{tpu_custom_call.1} parent=1 // pred_fallthru
      _
    // Predicated region
    $region14: #{tpu_custom_call.1} parent=1 // pred_check
      _
    $region15: #{tpu_custom_call.1} parent=1 // pred_check_branch
      %50 = sbr.rel (0) target = $region17
    $region16: #{tpu_custom_call.1} parent=1 // pred_region
      _
    $region17: #{tpu_custom_call.1} parent=1 // pred_fallthru
      _
    // Predicated region
    $region18: #{tpu_custom_call.1} parent=1 // pred_check
      _
    $region19: #{tpu_custom_call.1} parent=1 // pred_check_branch
      %52 = sbr.rel (0) target = $region21
    $region20: #{tpu_custom_call.1} parent=1 // pred_region
      %54 = dma.done [#allocation3], 256
    $region21: #{tpu_custom_call.1} parent=1 // pred_fallthru
      _
    // Predicated region
    $region22: #{tpu_custom_call.1} parent=1 // pred_check
      _
    $region23: #{tpu_custom_call.1} parent=1 // pred_check_branch
      %56 = sbr.rel (0) target = $region25
    $region24: #{tpu_custom_call.1} parent=1 // pred_region
      %58 = dma.done [#allocation6], 128
    $region25: #{tpu_custom_call.1} parent=1 // pred_fallthru
      _
    // Predicated region
    $region26: #{tpu_custom_call.1} parent=1 // pred_check
      _
    $region27: #{tpu_custom_call.1} parent=1 // pred_check_branch
      %60 = sbr.rel (0) target = $region29
    $region28: #{tpu_custom_call.1} parent=1 // pred_region
      %62 = dma.done [#allocation6], 384
    $region29: #{tpu_custom_call.1} parent=1 // pred_fallthru
      _
    %v63 = vld [vmem:[#allocation2] sm:$0xff]
    %v64 = vld [vmem:[#allocation2 + $0x8] sm:$0xff]
    %v65 = vld [vmem:[#allocation7] sm:$0xff]
    %v66 = vld [vmem:[#allocation7 + $0x8] sm:$0xff]
    %v67 = vld [vmem:[#allocation7 + $0x10] sm:$0xff]
    %vm68 = vcmask 195584
    %v70 = vsel %vm68, %v63, 0
    %v73 = vsel %vm68, %v64, 0
    %75 = vmatpush.msra.mxu0 0.0
    %76 = vmatpush.msra.mxu0 0.0
    %77 = vmatpush.msra.mxu0 0.0
    %78 = vmatpush.msra.mxu0 0.0
    %79 = vmatpush.msra.mxu0 0.0
    %80 = vmatpush.msra.mxu0 0.0
    %81 = vmatpush.msra.mxu0 0.0
    %82 = vmatpush.msra.mxu0 0.0
    %83 = vmatpush.msra.mxu0 0.0
    %84 = vmatpush.msra.mxu0 0.0
    %85 = vmatpush.msra.mxu0 0.0
    %86 = vmatpush.msra.mxu0 0.0
    %87 = vmatpush.msra.mxu0 0.0
    %88 = vmatpush.msra.mxu0 %v67
    %89 = vmatpush.msra.mxu0 %v66
    %90 = vmatpush.msra.mxu0 %v65
    %91 = vmatmul.f32.gmra.mxu0 %v70
    %v92 = vpop.f32.mrf.mxu0
    %v93 = vadd.f32 0.0, %v92
    %94 = vmatmul.f32.gmra.mxu0 %v73
    %v95 = vpop.f32.mrf.mxu0
    %v96 = vadd.f32 0.0, %v95
    %97 = vdwg.mxu0
    %v98 = vld [vmem:[#allocation5] sm:$0xff]
    %v99 = vadd.f32 %v93, %v98
    %v100 = vadd.f32 %v96, %v98
    %v101 = vtanh.pop %v99
    %v102 = vtanh.pop %v100
    %v103 = vld [vmem:[%s3] sm:$0x1]
    %vm104 = vcmask 261120
    %v106 = vsel %vm104, %v103, 0
    %v109 = vsel %vm104, %v101, 0
    %v112 = vsel %vm104, %v102, 0
    %114 = vmatpush.xpose.msra.mxu0 0.0
    %115 = vmatpush.xpose.msra.mxu0 0.0
    %116 = vmatpush.xpose.msra.mxu0 0.0
    %117 = vmatpush.xpose.msra.mxu0 0.0
    %118 = vmatpush.xpose.msra.mxu0 0.0
    %119 = vmatpush.xpose.msra.mxu0 0.0
    %120 = vmatpush.xpose.msra.mxu0 0.0
    %121 = vmatpush.xpose.msra.mxu0 0.0
    %122 = vmatpush.xpose.msra.mxu0 0.0
    %123 = vmatpush.xpose.msra.mxu0 0.0
    %124 = vmatpush.xpose.msra.mxu0 0.0
    %125 = vmatpush.xpose.msra.mxu0 0.0
    %126 = vmatpush.xpose.msra.mxu0 0.0
    %127 = vmatpush.xpose.msra.mxu0 0.0
    %128 = vmatpush.xpose.msra.mxu0 %v112
    %129 = vmatpush.xpose.msra.mxu0 %v109
    %130 = vmatmul.f32.gmra.mxu0 %v106
    %v131 = vpop.f32.mrf.mxu0
    %v132 = vadd.f32 0.0, %v131
    %133 = vdwg.mxu0
    %vm134 = vcmask 122880
    %135 = vst.msk [vmem:[#allocation8] sm:$0x1] %vm134, %v132
    // Predicated region
    $region30: #{tpu_custom_call.1} parent=1 // pred_check
      _
    $region31: #{tpu_custom_call.1} parent=1 // pred_check_branch
      %137 = sbr.rel (0) target = $region33
    $region32: #{tpu_custom_call.1} parent=1 // pred_region
      %139 = vsyncadd [#allocation4], 0
      %s141 = sshll.u32 [#allocation8], 4
      %s142 = int_to_ptr.vmem [resolvable:$true] %s141
      %s143 = sshll.u32 %s4, 4
      %s144 = int_to_ptr.hbm [resolvable:$true] %s143
      %146 = dma.vmem_to_hbm [thread:$0]  %s142, 16, %s144, [#allocation4]
    $region33: #{tpu_custom_call.1} parent=1 // pred_fallthru
      _
    // Predicated region
    $region34: #{tpu_custom_call.1} parent=1 // pred_check
      _
    $region35: #{tpu_custom_call.1} parent=1 // pred_check_branch
      %148 = sbr.rel (0) target = $region37
    $region36: #{tpu_custom_call.1} parent=1 // pred_region
      %150 = dma.done [#allocation4], 16
    $region37: #{tpu_custom_call.1} parent=1 // pred_fallthru
      _
    %151 = vsyncpa [#allocation3], 1
    %152 = vsyncpa [#allocation6], 1
    %153 = vsyncpa [#allocation4], 1

</llo_original>
